<compile_context>
chip_gen: v5e
topology: v5e:2x2
jax: 0.10.0
libtpu: 0.0.40
codegen_flags: <defaults>
</compile_context>

<pallas_src>
import jax
import jax.numpy as jnp
from jax import lax
from jax.experimental import pallas as pl
from jax.experimental.pallas import tpu as pltpu


def _resblock_kernel(x_ref, shift_ref, t1_ref, t2_ref, bn_ref, o_ref):
    """One batch element, lane-dense layout.

    x_ref     : (1, H, W*Cin)         input, channels-fastest in the lane dim
    shift_ref : (2, H, H)             [0]: row h -> row h-1, [1]: row h -> row h+1
                                      (zero rows at the image border)
    t1_ref    : (3, W*Cin, 2*W*Cout)  conv1 row-Toeplitz weights; the center row
                                      also carries the 1x1 shortcut in the last
                                      W*Cout output columns
    t2_ref    : (3, W*Cout, W*Cout)   conv2 row-Toeplitz weights
    bn_ref    : (6, W*Cout)           folded BN (s1, b1, s2, b2, s_sc, b_sc), W-tiled
    o_ref     : (1, H, W*Cout)
    """
    f32 = jnp.float32
    wco = o_ref.shape[2]

    x = x_ref[0]                                   # (H, W*Cin)
    s_prev = shift_ref[0]                          # picks row h-1 (0 at top border)
    s_next = shift_ref[1]                          # picks row h+1 (0 at bottom border)

    x_prev = jnp.dot(s_prev, x, preferred_element_type=f32)
    x_next = jnp.dot(s_next, x, preferred_element_type=f32)

    # ---- conv1 (+ fused 1x1 shortcut columns): 3 matmuls, K = W*Cin
    acc1 = (jnp.dot(x_prev, t1_ref[0], preferred_element_type=f32)
            + jnp.dot(x,      t1_ref[1], preferred_element_type=f32)
            + jnp.dot(x_next, t1_ref[2], preferred_element_type=f32))   # (H, 2*W*Cout)

    h1 = jnp.maximum(acc1[:, :wco] * bn_ref[0] + bn_ref[1], 0.0)        # BN1 + ReLU
    sc = acc1[:, wco:] * bn_ref[4] + bn_ref[5]                          # shortcut BN

    h1_prev = jnp.dot(s_prev, h1, preferred_element_type=f32)
    h1_next = jnp.dot(s_next, h1, preferred_element_type=f32)

    # ---- conv2: 3 matmuls, K = W*Cout
    acc2 = (jnp.dot(h1_prev, t2_ref[0], preferred_element_type=f32)
            + jnp.dot(h1,      t2_ref[1], preferred_element_type=f32)
            + jnp.dot(h1_next, t2_ref[2], preferred_element_type=f32))  # (H, W*Cout)

    h2 = acc2 * bn_ref[2] + bn_ref[3]                                   # BN2
    o_ref[0] = jnp.maximum(h2 + sc, 0.0).astype(o_ref.dtype)            # add + ReLU


def _fold_bn(gamma, beta, mean, var, eps=1e-5):
    scale = gamma / jnp.sqrt(var + eps)
    shift = beta - mean * scale
    return scale.astype(jnp.float32), shift.astype(jnp.float32)


def _row_toeplitz(w_oihw, W):
    """(Cout,Cin,3,3) OIHW conv weight -> (3, W*Cin, W*Cout), one matrix per kernel row.

    T[kh][(w+kw-1)*Cin + ci, w*Cout + co] = w[co, ci, kh, kw]; the W-direction
    zero padding of the conv is encoded by the missing off-band blocks.
    """
    mats = []
    for kh in range(3):
        t = None
        for kw in range(3):
            band = jnp.eye(W, k=-(kw - 1), dtype=jnp.float32)        # ones at [w+kw-1, w]
            blk = jnp.transpose(w_oihw[:, :, kh, kw], (1, 0)).astype(jnp.float32)
            piece = jnp.kron(band, blk)                              # (W*Cin, W*Cout)
            t = piece if t is None else t + piece
        mats.append(t)
    return jnp.stack(mats)


def residual_block(x_nchw, params):
    """x_nchw: (N, Cin, H, W) float32 -> (N, Cout, H, W) float32 (inference-mode BN)."""
    N, Cin, H, W = x_nchw.shape
    Cout = params["w1"].shape[0]
    wci, wco = W * Cin, W * Cout

    # lane-dense activations: (N, H, W*Cin)
    x = jnp.transpose(x_nchw, (0, 2, 3, 1)).reshape(N, H, wci)

    # H-direction halo as tiny shift matmuls (zero rows at the image border)
    shift = jnp.stack([jnp.eye(H, k=-1, dtype=jnp.float32),          # row h -> h-1
                       jnp.eye(H, k=1, dtype=jnp.float32)])          # row h -> h+1

    t1 = _row_toeplitz(params["w1"], W)                              # (3, W*Cin, W*Cout)
    t2 = _row_toeplitz(params["w2"], W)                              # (3, W*Cout, W*Cout)

    s1, b1 = _fold_bn(*params["bn1"])
    s2, b2 = _fold_bn(*params["bn2"])
    if "ws" in params:                                               # projection shortcut
        ws = jnp.transpose(params["ws"][:, :, 0, 0], (1, 0)).astype(jnp.float32)
        ss, bs = _fold_bn(*params["bns"])
    else:                                                            # identity shortcut
        ws = jnp.eye(Cin, dtype=jnp.float32)
        ss = jnp.ones((Cout,), jnp.float32)
        bs = jnp.zeros((Cout,), jnp.float32)

    # fold the 1x1 shortcut into conv1's center-row matmul (extra output columns)
    s_blk = jnp.kron(jnp.eye(W, dtype=jnp.float32), ws)              # (W*Cin, W*Cout)
    zeros = jnp.zeros_like(s_blk)
    t1_ext = jnp.stack([jnp.concatenate([t1[0], zeros], axis=1),
                        jnp.concatenate([t1[1], s_blk], axis=1),
                        jnp.concatenate([t1[2], zeros], axis=1)])    # (3, W*Cin, 2*W*Cout)

    bn = jnp.stack([jnp.tile(s1, W), jnp.tile(b1, W),
                    jnp.tile(s2, W), jnp.tile(b2, W),
                    jnp.tile(ss, W), jnp.tile(bs, W)])               # (6, W*Cout)

    kern = pl.pallas_call(
        _resblock_kernel,
        out_shape=jax.ShapeDtypeStruct((N, H, wco), jnp.float32),
        grid_spec=pltpu.PrefetchScalarGridSpec(
            num_scalar_prefetch=0,
            grid=(N,),
            in_specs=[
                pl.BlockSpec((1, H, wci), lambda n: (n, 0, 0)),
                pl.BlockSpec((2, H, H), lambda n: (0, 0, 0)),
                pl.BlockSpec((3, wci, 2 * wco), lambda n: (0, 0, 0)),
                pl.BlockSpec((3, wco, wco), lambda n: (0, 0, 0)),
                pl.BlockSpec((6, wco), lambda n: (0, 0)),
            ],
            out_specs=pl.BlockSpec((1, H, wco), lambda n: (n, 0, 0)),
        ),
        compiler_params=pltpu.CompilerParams(
            dimension_semantics=("parallel",)),   # batch elems independent -> megacore
    )
    y = kern(x, shift, t1_ext, t2, bn)                               # (N, H, W*Cout)
    return jnp.transpose(y.reshape(N, H, W, Cout), (0, 3, 1, 2))     # back to NCHW


# ---------------- pure-JAX reference (for correctness check) ----------------
def _ref_residual_block(x, params, eps=1e-5):
    def conv(inp, w, pad):
        return lax.conv_general_dilated(inp, w, (1, 1), [(pad, pad), (pad, pad)],
                                        dimension_numbers=("NCHW", "OIHW", "NCHW"))

    def bn(inp, p):
        g, b, m, v = p
        inv = g / jnp.sqrt(v + eps)
        return (inp - m[None, :, None, None]) * inv[None, :, None, None] + b[None, :, None, None]

    out = jax.nn.relu(bn(conv(x, params["w1"], 1), params["bn1"]))
    out = bn(conv(out, params["w2"], 1), params["bn2"])
    sc = bn(conv(x, params["ws"], 0), params["bns"]) if "ws" in params else x
    return jax.nn.relu(out + sc)


if __name__ == "__main__":
    # Small deterministic config: in_channels=4, out_channels=8, stride=1
    # (projection shortcut active because in_channels != out_channels).
    # W*Cout = 16*8 = 128 -> the kernel's output store is exactly lane-dense.
    N, Cin, Cout, H, W = 2, 4, 8, 16, 16
    key = jax.random.PRNGKey(0)
    ks = jax.random.split(key, 12)

    def bn_params(k, c):
        k1, k2, k3, k4 = jax.random.split(k, 4)
        gamma = 1.0 + 0.1 * jax.random.normal(k1, (c,), jnp.float32)
        beta = 0.1 * jax.random.normal(k2, (c,), jnp.float32)
        mean = 0.1 * jax.random.normal(k3, (c,), jnp.float32)
        var = jnp.abs(jax.random.normal(k4, (c,), jnp.float32)) + 0.5
        return (gamma, beta, mean, var)

    params = {
        "w1": 0.2 * jax.random.normal(ks[0], (Cout, Cin, 3, 3), jnp.float32),
        "bn1": bn_params(ks[1], Cout),
        "w2": 0.2 * jax.random.normal(ks[2], (Cout, Cout, 3, 3), jnp.float32),
        "bn2": bn_params(ks[3], Cout),
        "ws": 0.2 * jax.random.normal(ks[4], (Cout, Cin, 1, 1), jnp.float32),
        "bns": bn_params(ks[5], Cout),
    }

    x = jax.random.normal(ks[6], (N, Cin, H, W), jnp.float32)

    y = residual_block(x, params)
    y = jax.block_until_ready(y)

    y_ref = jax.block_until_ready(_ref_residual_block(x, params))
    assert y.shape == (N, Cout, H, W)
    assert jnp.allclose(y, y_ref, atol=2e-4, rtol=2e-4), float(jnp.max(jnp.abs(y - y_ref)))

    print("KERNEL_OK")
</pallas_src>

<mosaic_0001>
module attributes {stable_mosaic.version = 11 : i64} {
  func.func @_resblock_kernel(%arg0: i32, %arg1: memref<1x16x64xf32, #tpu.memory_space<vmem>>, %arg2: memref<2x16x16xf32, #tpu.memory_space<vmem>>, %arg3: memref<3x64x256xf32, #tpu.memory_space<vmem>>, %arg4: memref<3x128x128xf32, #tpu.memory_space<vmem>>, %arg5: memref<6x128xf32, #tpu.memory_space<vmem>>, %arg6: memref<1x16x128xf32, #tpu.memory_space<vmem>>) attributes {dimension_semantics = [#tpu.dimension_semantics<parallel>], iteration_bounds = array<i64: 2>, scalar_prefetch = 0 : i64, scratch_operands = 0 : i64, tpu.core_type = #tpu.core_type<tc>, window_params = [{transform_indices = @transform_0, window_bounds = array<i64: 1, 16, 64>}, {pipeline_mode = #tpu.pipeline_mode<synchronous>, transform_indices = @transform_1, window_bounds = array<i64: 2, 16, 16>}, {pipeline_mode = #tpu.pipeline_mode<synchronous>, transform_indices = @transform_2, window_bounds = array<i64: 3, 64, 256>}, {pipeline_mode = #tpu.pipeline_mode<synchronous>, transform_indices = @transform_3, window_bounds = array<i64: 3, 128, 128>}, {pipeline_mode = #tpu.pipeline_mode<synchronous>, transform_indices = @transform_4, window_bounds = array<i64: 6, 128>}, {transform_indices = @transform_5, window_bounds = array<i64: 1, 16, 128>}]} {
    %c0 = arith.constant 0 : index
    %c0_0 = arith.constant 0 : index
    %c0_1 = arith.constant 0 : index
    %0 = vector.load %arg1[%c0, %c0_0, %c0_1] : memref<1x16x64xf32, #tpu.memory_space<vmem>>, vector<1x16x64xf32>
    %1 = vector.shape_cast %0 : vector<1x16x64xf32> to vector<16x64xf32>
    %c0_2 = arith.constant 0 : index
    %c0_3 = arith.constant 0 : index
    %c0_4 = arith.constant 0 : index
    %2 = vector.load %arg2[%c0_2, %c0_3, %c0_4] : memref<2x16x16xf32, #tpu.memory_space<vmem>>, vector<1x16x16xf32>
    %3 = vector.shape_cast %2 : vector<1x16x16xf32> to vector<16x16xf32>
    %c1 = arith.constant 1 : index
    %c0_5 = arith.constant 0 : index
    %c0_6 = arith.constant 0 : index
    %4 = vector.load %arg2[%c1, %c0_5, %c0_6] : memref<2x16x16xf32, #tpu.memory_space<vmem>>, vector<1x16x16xf32>
    %5 = vector.shape_cast %4 : vector<1x16x16xf32> to vector<16x16xf32>
    %cst = arith.constant dense<0.000000e+00> : vector<16x64xf32>
    %6 = tpu.matmul %3, %1, %cst {dimension_numbers = #tpu.dot_dimension_numbers<[1], [0], [0], [1], [0, 0, 1, 1], [], []>} : vector<16x16xf32>, vector<16x64xf32>, vector<16x64xf32> -> vector<16x64xf32>
    %cst_7 = arith.constant dense<0.000000e+00> : vector<16x64xf32>
    %7 = tpu.matmul %5, %1, %cst_7 {dimension_numbers = #tpu.dot_dimension_numbers<[1], [0], [0], [1], [0, 0, 1, 1], [], []>} : vector<16x16xf32>, vector<16x64xf32>, vector<16x64xf32> -> vector<16x64xf32>
    %c0_8 = arith.constant 0 : index
    %c0_9 = arith.constant 0 : index
    %c0_10 = arith.constant 0 : index
    %8 = vector.load %arg3[%c0_8, %c0_9, %c0_10] : memref<3x64x256xf32, #tpu.memory_space<vmem>>, vector<1x64x256xf32>
    %9 = vector.shape_cast %8 : vector<1x64x256xf32> to vector<64x256xf32>
    %cst_11 = arith.constant dense<0.000000e+00> : vector<16x256xf32>
    %10 = tpu.matmul %6, %9, %cst_11 {dimension_numbers = #tpu.dot_dimension_numbers<[1], [0], [0], [1], [0, 0, 1, 1], [], []>} : vector<16x64xf32>, vector<64x256xf32>, vector<16x256xf32> -> vector<16x256xf32>
    %c1_12 = arith.constant 1 : index
    %c0_13 = arith.constant 0 : index
    %c0_14 = arith.constant 0 : index
    %11 = vector.load %arg3[%c1_12, %c0_13, %c0_14] : memref<3x64x256xf32, #tpu.memory_space<vmem>>, vector<1x64x256xf32>
    %12 = vector.shape_cast %11 : vector<1x64x256xf32> to vector<64x256xf32>
    %cst_15 = arith.constant dense<0.000000e+00> : vector<16x256xf32>
    %13 = tpu.matmul %1, %12, %cst_15 {dimension_numbers = #tpu.dot_dimension_numbers<[1], [0], [0], [1], [0, 0, 1, 1], [], []>} : vector<16x64xf32>, vector<64x256xf32>, vector<16x256xf32> -> vector<16x256xf32>
    %14 = arith.addf %10, %13 : vector<16x256xf32>
    %c2 = arith.constant 2 : index
    %c0_16 = arith.constant 0 : index
    %c0_17 = arith.constant 0 : index
    %15 = vector.load %arg3[%c2, %c0_16, %c0_17] : memref<3x64x256xf32, #tpu.memory_space<vmem>>, vector<1x64x256xf32>
    %16 = vector.shape_cast %15 : vector<1x64x256xf32> to vector<64x256xf32>
    %cst_18 = arith.constant dense<0.000000e+00> : vector<16x256xf32>
    %17 = tpu.matmul %7, %16, %cst_18 {dimension_numbers = #tpu.dot_dimension_numbers<[1], [0], [0], [1], [0, 0, 1, 1], [], []>} : vector<16x64xf32>, vector<64x256xf32>, vector<16x256xf32> -> vector<16x256xf32>
    %18 = arith.addf %14, %17 : vector<16x256xf32>
    %19 = vector.extract_strided_slice %18 {offsets = [0, 0], sizes = [16, 128], strides = [1, 1]} : vector<16x256xf32> to vector<16x128xf32>
    %c0_19 = arith.constant 0 : index
    %c0_20 = arith.constant 0 : index
    %20 = vector.load %arg5[%c0_19, %c0_20] : memref<6x128xf32, #tpu.memory_space<vmem>>, vector<1x128xf32>
    %21 = vector.shape_cast %20 : vector<1x128xf32> to vector<128xf32>
    %22 = vector.shape_cast %21 : vector<128xf32> to vector<1x128xf32>
    %23 = vector.broadcast %22 : vector<1x128xf32> to vector<16x128xf32>
    %24 = arith.mulf %19, %23 : vector<16x128xf32>
    %c1_21 = arith.constant 1 : index
    %c0_22 = arith.constant 0 : index
    %25 = vector.load %arg5[%c1_21, %c0_22] : memref<6x128xf32, #tpu.memory_space<vmem>>, vector<1x128xf32>
    %26 = vector.shape_cast %25 : vector<1x128xf32> to vector<128xf32>
    %27 = vector.shape_cast %26 : vector<128xf32> to vector<1x128xf32>
    %28 = vector.broadcast %27 : vector<1x128xf32> to vector<16x128xf32>
    %29 = arith.addf %24, %28 : vector<16x128xf32>
    %cst_23 = arith.constant 0.000000e+00 : f32
    %30 = vector.broadcast %cst_23 : f32 to vector<16x128xf32>
    %31 = arith.maximumf %29, %30 : vector<16x128xf32>
    %32 = vector.extract_strided_slice %18 {offsets = [0, 128], sizes = [16, 128], strides = [1, 1]} : vector<16x256xf32> to vector<16x128xf32>
    %c4 = arith.constant 4 : index
    %c0_24 = arith.constant 0 : index
    %33 = vector.load %arg5[%c4, %c0_24] : memref<6x128xf32, #tpu.memory_space<vmem>>, vector<1x128xf32>
    %34 = vector.shape_cast %33 : vector<1x128xf32> to vector<128xf32>
    %35 = vector.shape_cast %34 : vector<128xf32> to vector<1x128xf32>
    %36 = vector.broadcast %35 : vector<1x128xf32> to vector<16x128xf32>
    %37 = arith.mulf %32, %36 : vector<16x128xf32>
    %c5 = arith.constant 5 : index
    %c0_25 = arith.constant 0 : index
    %38 = vector.load %arg5[%c5, %c0_25] : memref<6x128xf32, #tpu.memory_space<vmem>>, vector<1x128xf32>
    %39 = vector.shape_cast %38 : vector<1x128xf32> to vector<128xf32>
    %40 = vector.shape_cast %39 : vector<128xf32> to vector<1x128xf32>
    %41 = vector.broadcast %40 : vector<1x128xf32> to vector<16x128xf32>
    %42 = arith.addf %37, %41 : vector<16x128xf32>
    %cst_26 = arith.constant dense<0.000000e+00> : vector<16x128xf32>
    %43 = tpu.matmul %3, %31, %cst_26 {dimension_numbers = #tpu.dot_dimension_numbers<[1], [0], [0], [1], [0, 0, 1, 1], [], []>} : vector<16x16xf32>, vector<16x128xf32>, vector<16x128xf32> -> vector<16x128xf32>
    %cst_27 = arith.constant dense<0.000000e+00> : vector<16x128xf32>
    %44 = tpu.matmul %5, %31, %cst_27 {dimension_numbers = #tpu.dot_dimension_numbers<[1], [0], [0], [1], [0, 0, 1, 1], [], []>} : vector<16x16xf32>, vector<16x128xf32>, vector<16x128xf32> -> vector<16x128xf32>
    %c0_28 = arith.constant 0 : index
    %c0_29 = arith.constant 0 : index
    %c0_30 = arith.constant 0 : index
    %45 = vector.load %arg4[%c0_28, %c0_29, %c0_30] : memref<3x128x128xf32, #tpu.memory_space<vmem>>, vector<1x128x128xf32>
    %46 = vector.shape_cast %45 : vector<1x128x128xf32> to vector<128x128xf32>
    %cst_31 = arith.constant dense<0.000000e+00> : vector<16x128xf32>
    %47 = tpu.matmul %43, %46, %cst_31 {dimension_numbers = #tpu.dot_dimension_numbers<[1], [0], [0], [1], [0, 0, 1, 1], [], []>} : vector<16x128xf32>, vector<128x128xf32>, vector<16x128xf32> -> vector<16x128xf32>
    %c1_32 = arith.constant 1 : index
    %c0_33 = arith.constant 0 : index
    %c0_34 = arith.constant 0 : index
    %48 = vector.load %arg4[%c1_32, %c0_33, %c0_34] : memref<3x128x128xf32, #tpu.memory_space<vmem>>, vector<1x128x128xf32>
    %49 = vector.shape_cast %48 : vector<1x128x128xf32> to vector<128x128xf32>
    %cst_35 = arith.constant dense<0.000000e+00> : vector<16x128xf32>
    %50 = tpu.matmul %31, %49, %cst_35 {dimension_numbers = #tpu.dot_dimension_numbers<[1], [0], [0], [1], [0, 0, 1, 1], [], []>} : vector<16x128xf32>, vector<128x128xf32>, vector<16x128xf32> -> vector<16x128xf32>
    %51 = arith.addf %47, %50 : vector<16x128xf32>
    %c2_36 = arith.constant 2 : index
    %c0_37 = arith.constant 0 : index
    %c0_38 = arith.constant 0 : index
    %52 = vector.load %arg4[%c2_36, %c0_37, %c0_38] : memref<3x128x128xf32, #tpu.memory_space<vmem>>, vector<1x128x128xf32>
    %53 = vector.shape_cast %52 : vector<1x128x128xf32> to vector<128x128xf32>
    %cst_39 = arith.constant dense<0.000000e+00> : vector<16x128xf32>
    %54 = tpu.matmul %44, %53, %cst_39 {dimension_numbers = #tpu.dot_dimension_numbers<[1], [0], [0], [1], [0, 0, 1, 1], [], []>} : vector<16x128xf32>, vector<128x128xf32>, vector<16x128xf32> -> vector<16x128xf32>
    %55 = arith.addf %51, %54 : vector<16x128xf32>
    %c2_40 = arith.constant 2 : index
    %c0_41 = arith.constant 0 : index
    %56 = vector.load %arg5[%c2_40, %c0_41] : memref<6x128xf32, #tpu.memory_space<vmem>>, vector<1x128xf32>
    %57 = vector.shape_cast %56 : vector<1x128xf32> to vector<128xf32>
    %58 = vector.shape_cast %57 : vector<128xf32> to vector<1x128xf32>
    %59 = vector.broadcast %58 : vector<1x128xf32> to vector<16x128xf32>
    %60 = arith.mulf %55, %59 : vector<16x128xf32>
    %c3 = arith.constant 3 : index
    %c0_42 = arith.constant 0 : index
    %61 = vector.load %arg5[%c3, %c0_42] : memref<6x128xf32, #tpu.memory_space<vmem>>, vector<1x128xf32>
    %62 = vector.shape_cast %61 : vector<1x128xf32> to vector<128xf32>
    %63 = vector.shape_cast %62 : vector<128xf32> to vector<1x128xf32>
    %64 = vector.broadcast %63 : vector<1x128xf32> to vector<16x128xf32>
    %65 = arith.addf %60, %64 : vector<16x128xf32>
    %66 = arith.addf %65, %42 : vector<16x128xf32>
    %cst_43 = arith.constant 0.000000e+00 : f32
    %67 = vector.broadcast %cst_43 : f32 to vector<16x128xf32>
    %68 = arith.maximumf %66, %67 : vector<16x128xf32>
    %c0_44 = arith.constant 0 : index
    %c0_45 = arith.constant 0 : index
    %c0_46 = arith.constant 0 : index
    %69 = vector.load %arg6[%c0_44, %c0_45, %c0_46] : memref<1x16x128xf32, #tpu.memory_space<vmem>>, vector<1x16x128xf32>
    %70 = vector.shape_cast %69 : vector<1x16x128xf32> to vector<16x128xf32>
    %71 = vector.shape_cast %68 : vector<16x128xf32> to vector<1x16x128xf32>
    tpu.vector_store %arg6[%c0_44, %c0_45, %c0_46], %71 {strides = array<i32>} : memref<1x16x128xf32, #tpu.memory_space<vmem>>, vector<1x16x128xf32>,
    return
  }
  func.func @transform_0(%arg0: i32) -> (i32, i32, i32) {
    %c0_i32 = arith.constant 0 : i32
    %c0_i32_0 = arith.constant 0 : i32
    %c0_i32_1 = arith.constant 0 : i32
    return %arg0, %c0_i32, %c0_i32_0 : i32, i32, i32
  }
  func.func @transform_1(%arg0: i32) -> (i32, i32, i32) {
    %c0_i32 = arith.constant 0 : i32
    %c0_i32_0 = arith.constant 0 : i32
    %c0_i32_1 = arith.constant 0 : i32
    %c0_i32_2 = arith.constant 0 : i32
    return %c0_i32, %c0_i32_0, %c0_i32_1 : i32, i32, i32
  }
  func.func @transform_2(%arg0: i32) -> (i32, i32, i32) {
    %c0_i32 = arith.constant 0 : i32
    %c0_i32_0 = arith.constant 0 : i32
    %c0_i32_1 = arith.constant 0 : i32
    %c0_i32_2 = arith.constant 0 : i32
    return %c0_i32, %c0_i32_0, %c0_i32_1 : i32, i32, i32
  }
  func.func @transform_3(%arg0: i32) -> (i32, i32, i32) {
    %c0_i32 = arith.constant 0 : i32
    %c0_i32_0 = arith.constant 0 : i32
    %c0_i32_1 = arith.constant 0 : i32
    %c0_i32_2 = arith.constant 0 : i32
    return %c0_i32, %c0_i32_0, %c0_i32_1 : i32, i32, i32
  }
  func.func @transform_4(%arg0: i32) -> (i32, i32) {
    %c0_i32 = arith.constant 0 : i32
    %c0_i32_0 = arith.constant 0 : i32
    %c0_i32_1 = arith.constant 0 : i32
    return %c0_i32, %c0_i32_0 : i32, i32
  }
  func.func @transform_5(%arg0: i32) -> (i32, i32, i32) {
    %c0_i32 = arith.constant 0 : i32
    %c0_i32_0 = arith.constant 0 : i32
    %c0_i32_1 = arith.constant 0 : i32
    return %arg0, %c0_i32, %c0_i32_0 : i32, i32, i32
  }
}

</mosaic_0001>

<llo_original>
// kernel: tpu_custom_call.1
$region0: #{tpu_custom_call.1}
  #allocation0 [shape = 'u32[]', space=smem, size = 0x4, offset = 0x4, fixed_abs, tag = 'smem constant byte address 0x4 - core index']
  #allocation1 [shape = 'u32[72,128]{1,0:T(1,128)}', space=vmem, size = 0x9000, scoped, tag = 'internal scratch']
  %s0 = inlined_call_operand.hbm [shape: f32[2,16,64], index: 0, kind: input, shape index: {}]
  %s1 = inlined_call_operand.hbm [shape: f32[2,16,16], index: 1, kind: input, shape index: {}]
  %s2 = inlined_call_operand.hbm [shape: f32[3,64,256], index: 2, kind: input, shape index: {}]
  %s3 = inlined_call_operand.hbm [shape: f32[3,128,128], index: 3, kind: input, shape index: {}]
  %s4 = inlined_call_operand.hbm [shape: f32[6,128], index: 4, kind: input, shape index: {}]
  %s5 = inlined_call_operand.hbm [shape: f32[2,16,128], index: 5, kind: output, shape index: {}]
  %s6 = sld [smem:[#allocation0]]
  $region73: #{tpu_custom_call.1} parent=0
    _
  %s8 = ssub.s32 1, %s6
  %s9 = scalar_select 0, %s8, %s6
  $region1: #{tpu_custom_call.1} parent=0
    #allocation2 [shape = 'u8[16384]{0}', space=vmem, size = 0x4000, scoped, tag = 'input window, operand 0']
    #allocation3 [shape = 's32[2]{0}', space=sflag, size = 0x8, scoped, tag = 'scoped memory for tpu_custom_call.1']
    #allocation4 [shape = 's32[2]{0}', space=sflag, size = 0x8, scoped, tag = 'scoped memory for tpu_custom_call.1']
    #allocation5 [shape = 'u8[16384]{0}', space=vmem, size = 0x4000, scoped, tag = 'input window, operand 1, single buffered']
    #allocation6 [shape = 's32[1]{0}', space=sflag, size = 0x4, scoped, tag = 'scoped memory for tpu_custom_call.1']
    #allocation7 [shape = 'u8[196608]{0}', space=vmem, size = 0x30000, scoped, tag = 'input window, operand 2, single buffered']
    #allocation8 [shape = 'u8[196608]{0}', space=vmem, size = 0x30000, scoped, tag = 'input window, operand 3, single buffered']
    #allocation9 [shape = 's32[1]{0}', space=sflag, size = 0x4, scoped, tag = 'scoped memory for tpu_custom_call.1']
    #allocation10 [shape = 'u8[4096]{0}', space=vmem, size = 0x1000, scoped, tag = 'input window, operand 4, single buffered']
    #allocation11 [shape = 'u8[16384]{0}', space=vmem, size = 0x4000, scoped, tag = 'output window, operand 0']
    %10 = vsyncpa [#allocation3], 0
    %s11 = scalar_lea.sflag [#allocation3], 1
    %12 = vsyncpa %s11, 0
    %13 = vsyncpa [#allocation6], 0
    %14 = vsyncpa [#allocation9], 0
    %15 = vsyncpa [#allocation4], 0
    %s16 = scalar_lea.sflag [#allocation4], 1
    %17 = vsyncpa %s16, 0
    loop: start=0, step=1, limit=4
    $region2: #{tpu_custom_call.1} parent=1 // loop_pre_header
      _
    $region3: #{tpu_custom_call.1} parent=1 // loop_header
      %s19 = sphi 0, %s23
      %p20 = scmp.ge.s32.totalorder %s19, 4
      %s29 = sphi 0, %s31
      %s32 = sphi 0, %s29
      %s33 = sphi 0, %s32
      %s49 = sphi 0, %s33
      %s53 = sphi 0, %s53
      %s55 = sphi 0, %s53
      %s56 = sphi 0, %s55
      %s70 = sphi 0, %s56
      %s74 = sphi 0, %s74
      %s76 = sphi 0, %s74
      %s77 = sphi 0, %s76
      %s91 = sphi 0, %s77
      %s95 = sphi 0, %s95
      %s97 = sphi 0, %s95
      %s98 = sphi 0, %s97
      %s112 = sphi 0, %s98
      %s116 = sphi 0, %s116
      %s118 = sphi 0, %s116
      %s119 = sphi 0, %s118
      %s133 = sphi 0, %s119
      %s139 = sphi 0, %s141
      %s142 = sphi 0, %s139
      %s143 = sphi 0, %s142
      %s159 = sphi 0, %s143
    $region4: #{tpu_custom_call.1} parent=1 // loop_header_branch
      %22 = sbr.rel (%p20) target = $region8
    $region5: #{tpu_custom_call.1} parent=1 // loop_body
      %s24 = ssub.s32 %s19, 1
      %s25 = ssub.s32 %s19, 2
      %s26 = sadd.s32 %s19, 1
      %s27 = ssub.s32 %s19, %s26
      %p28 = scmp.eq.s32.totalorder %s27, 0
      %s30 = sadd.s32 %s29, 1
      %s31 = scalar_select %p28, %s29, %s30
      %p34 = pneg %p28
      %p35 = scmp.eq.s32.totalorder %s19, 1
      %p36 = por %p34, %p35
      %p37 = scmp.ne.s32.totalorder %s29, %s32
      %p38 = scmp.eq.s32.totalorder %s19, 0
      %p39 = por %p37, %p38
      %p40 = scmp.ne.s32.totalorder %s29, %s32
      %p41 = scmp.eq.s32.totalorder %s24, 1
      %p42 = por %p40, %p41
      %p43 = scmp.ne.s32.totalorder %s32, %s33
      %p44 = scmp.eq.s32.totalorder %s24, 0
      %p45 = por %p43, %p44
      %p46 = scmp.ne.s32.totalorder %s32, %s33
      %p47 = scmp.eq.s32.totalorder %s25, 1
      %p48 = por %p46, %p47
      %p50 = scmp.ne.s32.totalorder %s33, %s49
      %p51 = scmp.eq.s32.totalorder %s25, 0
      %p52 = por %p50, %p51
      %s54 = sadd.s32 %s53, 1
      %p57 = scmp.eq.s32.totalorder %s19, 1
      %p58 = scmp.ne.s32.totalorder %s53, %s55
      %p59 = scmp.eq.s32.totalorder %s19, 0
      %p60 = por %p58, %p59
      %p61 = scmp.ne.s32.totalorder %s53, %s55
      %p62 = scmp.eq.s32.totalorder %s24, 1
      %p63 = por %p61, %p62
      %p64 = scmp.ne.s32.totalorder %s55, %s56
      %p65 = scmp.eq.s32.totalorder %s24, 0
      %p66 = por %p64, %p65
      %p67 = scmp.ne.s32.totalorder %s55, %s56
      %p68 = scmp.eq.s32.totalorder %s25, 1
      %p69 = por %p67, %p68
      %p71 = scmp.ne.s32.totalorder %s56, %s70
      %p72 = scmp.eq.s32.totalorder %s25, 0
      %p73 = por %p71, %p72
      %s75 = sadd.s32 %s74, 1
      %p78 = scmp.eq.s32.totalorder %s19, 1
      %p79 = scmp.ne.s32.totalorder %s74, %s76
      %p80 = scmp.eq.s32.totalorder %s19, 0
      %p81 = por %p79, %p80
      %p82 = scmp.ne.s32.totalorder %s74, %s76
      %p83 = scmp.eq.s32.totalorder %s24, 1
      %p84 = por %p82, %p83
      %p85 = scmp.ne.s32.totalorder %s76, %s77
      %p86 = scmp.eq.s32.totalorder %s24, 0
      %p87 = por %p85, %p86
      %p88 = scmp.ne.s32.totalorder %s76, %s77
      %p89 = scmp.eq.s32.totalorder %s25, 1
      %p90 = por %p88, %p89
      %p92 = scmp.ne.s32.totalorder %s77, %s91
      %p93 = scmp.eq.s32.totalorder %s25, 0
      %p94 = por %p92, %p93
      %s96 = sadd.s32 %s95, 1
      %p99 = scmp.eq.s32.totalorder %s19, 1
      %p100 = scmp.ne.s32.totalorder %s95, %s97
      %p101 = scmp.eq.s32.totalorder %s19, 0
      %p102 = por %p100, %p101
      %p103 = scmp.ne.s32.totalorder %s95, %s97
      %p104 = scmp.eq.s32.totalorder %s24, 1
      %p105 = por %p103, %p104
      %p106 = scmp.ne.s32.totalorder %s97, %s98
      %p107 = scmp.eq.s32.totalorder %s24, 0
      %p108 = por %p106, %p107
      %p109 = scmp.ne.s32.totalorder %s97, %s98
      %p110 = scmp.eq.s32.totalorder %s25, 1
      %p111 = por %p109, %p110
      %p113 = scmp.ne.s32.totalorder %s98, %s112
      %p114 = scmp.eq.s32.totalorder %s25, 0
      %p115 = por %p113, %p114
      %s117 = sadd.s32 %s116, 1
      %p120 = scmp.eq.s32.totalorder %s19, 1
      %p121 = scmp.ne.s32.totalorder %s116, %s118
      %p122 = scmp.eq.s32.totalorder %s19, 0
      %p123 = por %p121, %p122
      %p124 = scmp.ne.s32.totalorder %s116, %s118
      %p125 = scmp.eq.s32.totalorder %s24, 1
      %p126 = por %p124, %p125
      %p127 = scmp.ne.s32.totalorder %s118, %s119
      %p128 = scmp.eq.s32.totalorder %s24, 0
      %p129 = por %p127, %p128
      %p130 = scmp.ne.s32.totalorder %s118, %s119
      %p131 = scmp.eq.s32.totalorder %s25, 1
      %p132 = por %p130, %p131
      %p134 = scmp.ne.s32.totalorder %s119, %s133
      %p135 = scmp.eq.s32.totalorder %s25, 0
      %p136 = por %p134, %p135
      %s137 = ssub.s32 %s19, %s26
      %p138 = scmp.eq.s32.totalorder %s137, 0
      %s140 = sadd.s32 %s139, 1
      %s141 = scalar_select %p138, %s139, %s140
      %p144 = pneg %p138
      %p145 = scmp.eq.s32.totalorder %s19, 1
      %p146 = por %p144, %p145
      %p147 = scmp.ne.s32.totalorder %s139, %s142
      %p148 = scmp.eq.s32.totalorder %s19, 0
      %p149 = por %p147, %p148
      %p150 = scmp.ne.s32.totalorder %s139, %s142
      %p151 = scmp.eq.s32.totalorder %s24, 1
      %p152 = por %p150, %p151
      %p153 = scmp.ne.s32.totalorder %s142, %s143
      %p154 = scmp.eq.s32.totalorder %s24, 0
      %p155 = por %p153, %p154
      %p156 = scmp.ne.s32.totalorder %s142, %s143
      %p157 = scmp.eq.s32.totalorder %s25, 1
      %p158 = por %p156, %p157
      %p160 = scmp.ne.s32.totalorder %s143, %s159
      %p161 = scmp.eq.s32.totalorder %s25, 0
      %p162 = por %p160, %p161
      %p163 = scmp.le.s32.totalorder 1, %s19
      %p164 = scmp.lt.s32.totalorder %s19, 3
      %p165 = pnand %p163, %p164
      %p166 = pneg %p165
      // Predicated region
      $region9: #{tpu_custom_call.1} parent=5 // pred_check
        _
      $region10: #{tpu_custom_call.1} parent=5 // pred_check_branch
        %168 = sbr.rel (%p165) target = $region12
      $region11: #{tpu_custom_call.1} parent=5 // pred_region
        %s169 = ssub.s32 %s19, 1
        // Predicated region
        $region13: #{tpu_custom_call.1} parent=11 // pred_check
          %p170 = pneg %p66
        $region14: #{tpu_custom_call.1} parent=11 // pred_check_branch
          %172 = sbr.rel (%p170) target = $region16
        $region15: #{tpu_custom_call.1} parent=11 // pred_region
          %174 = vsyncadd [#allocation6], 0
          %s175 = sshll.u32 %s1, 4
          %s176 = int_to_ptr.hbm [resolvable:$true] %s175
          %s177 = sshll.u32 [#allocation5], 4
          %s178 = int_to_ptr.vmem [resolvable:$true] %s177
          %183 = dma.hbm_to_vmem [thread:$0]  %s176, 512, %s178, [#allocation6], 128, 128, 8
        $region16: #{tpu_custom_call.1} parent=11 // pred_fallthru
          _
        // Predicated region
        $region17: #{tpu_custom_call.1} parent=11 // pred_check
          %p184 = pneg %p87
        $region18: #{tpu_custom_call.1} parent=11 // pred_check_branch
          %186 = sbr.rel (%p184) target = $region20
        $region19: #{tpu_custom_call.1} parent=11 // pred_region
          %188 = vsyncadd [#allocation6], 0
          %s189 = sshll.u32 %s2, 4
          %s190 = int_to_ptr.hbm [resolvable:$true] %s189
          %s191 = sshll.u32 [#allocation7], 4
          %s192 = int_to_ptr.vmem [resolvable:$true] %s191
          %197 = dma.hbm_to_vmem [thread:$0]  %s190, 6144, %s192, [#allocation6], 256, 256, 16
        $region20: #{tpu_custom_call.1} parent=11 // pred_fallthru
          _
        // Predicated region
        $region21: #{tpu_custom_call.1} parent=11 // pred_check
          %p198 = pneg %p108
        $region22: #{tpu_custom_call.1} parent=11 // pred_check_branch
          %200 = sbr.rel (%p198) target = $region24
        $region23: #{tpu_custom_call.1} parent=11 // pred_region
          %202 = vsyncadd [#allocation9], 0
          %s203 = sshll.u32 %s3, 4
          %s204 = int_to_ptr.hbm [resolvable:$true] %s203
          %s205 = sshll.u32 [#allocation8], 4
          %s206 = int_to_ptr.vmem [resolvable:$true] %s205
          %211 = dma.hbm_to_vmem [thread:$0]  %s204, 6144, %s206, [#allocation9], 128, 128, 8
        $region24: #{tpu_custom_call.1} parent=11 // pred_fallthru
          _
        // Predicated region
        $region25: #{tpu_custom_call.1} parent=11 // pred_check
          %p212 = pneg %p129
        $region26: #{tpu_custom_call.1} parent=11 // pred_check_branch
          %214 = sbr.rel (%p212) target = $region28
        $region27: #{tpu_custom_call.1} parent=11 // pred_region
          %216 = vsyncadd [#allocation9], 0
          %s218 = sshll.u32 %s4, 4
          %s219 = int_to_ptr.hbm [resolvable:$true] %s218
          %s220 = sshll.u32 [#allocation10], 4
          %s221 = int_to_ptr.vmem [resolvable:$true] %s220
          %223 = dma.hbm_to_vmem [thread:$0]  %s219, 128, %s221, [#allocation9]
        $region28: #{tpu_custom_call.1} parent=11 // pred_fallthru
          _
      $region12: #{tpu_custom_call.1} parent=5 // pred_fallthru
        _
      %p224 = scmp.lt.s32.totalorder %s19, 2
      // Predicated region
      $region29: #{tpu_custom_call.1} parent=5 // pred_check
        %p225 = pneg %p224
      $region30: #{tpu_custom_call.1} parent=5 // pred_check_branch
        %227 = sbr.rel (%p225) target = $region32
      $region31: #{tpu_custom_call.1} parent=5 // pred_region
        // Predicated region
        $region33: #{tpu_custom_call.1} parent=31 // pred_check
          %p228 = pneg %p39
        $region34: #{tpu_custom_call.1} parent=31 // pred_check_branch
          %230 = sbr.rel (%p228) target = $region36
        $region35: #{tpu_custom_call.1} parent=31 // pred_region
          %s231 = sand.u32 %s29, 1
          %s232 = scalar_lea.sflag [#allocation3], %s231
          %s233 = sand.u32 %s29, 1
          %s234 = smul.addr %s233, 16
          %s235 = scalar_lea.vmem [#allocation2], %s234
          %237 = vsyncadd %s232, 0
          %s238 = smul.addr %s19, 2
          %s239 = smul.addr %s238, 8
          %s240 = scalar_lea.hbm %s0, %s239
          %s241 = sshll.u32 %s240, 4
          %s242 = int_to_ptr.hbm [resolvable:$true] %s241
          %s243 = sshll.u32 %s235, 4
          %s244 = int_to_ptr.vmem [resolvable:$true] %s243
          %249 = dma.hbm_to_vmem [thread:$0]  %s242, 256, %s244, %s232, 128, 128, 8
        $region36: #{tpu_custom_call.1} parent=31 // pred_fallthru
          _
      $region32: #{tpu_custom_call.1} parent=5 // pred_fallthru
        _
      %p250 = scmp.le.s32.totalorder 1, %s19
      %p251 = scmp.lt.s32.totalorder %s19, 3
      %p252 = pnand %p250, %p251
      %p253 = pneg %p252
      // Predicated region
      $region37: #{tpu_custom_call.1} parent=5 // pred_check
        _
      $region38: #{tpu_custom_call.1} parent=5 // pred_check_branch
        %255 = sbr.rel (%p252) target = $region40
      $region39: #{tpu_custom_call.1} parent=5 // pred_region
        %s256 = ssub.s32 %s19, 1
        %s257 = sand.u32 %s32, 1
        %s258 = scalar_lea.sflag [#allocation3], %s257
        %s259 = sand.u32 %s32, 1
        %s260 = smul.addr %s259, 16
        %s261 = scalar_lea.vmem [#allocation2], %s260
        // Predicated region
        $region41: #{tpu_custom_call.1} parent=39 // pred_check
          %p262 = pneg %p45
        $region42: #{tpu_custom_call.1} parent=39 // pred_check_branch
          %264 = sbr.rel (%p262) target = $region44
        $region43: #{tpu_custom_call.1} parent=39 // pred_region
          %266 = dma.done %s258, 256
        $region44: #{tpu_custom_call.1} parent=39 // pred_fallthru
          _
        // Predicated region
        $region45: #{tpu_custom_call.1} parent=39 // pred_check
          %p267 = pneg %p66
        $region46: #{tpu_custom_call.1} parent=39 // pred_check_branch
          %269 = sbr.rel (%p267) target = $region48
        $region47: #{tpu_custom_call.1} parent=39 // pred_region
          %271 = dma.done [#allocation6], 512
        $region48: #{tpu_custom_call.1} parent=39 // pred_fallthru
          _
        // Predicated region
        $region49: #{tpu_custom_call.1} parent=39 // pred_check
          %p272 = pneg %p87
        $region50: #{tpu_custom_call.1} parent=39 // pred_check_branch
          %274 = sbr.rel (%p272) target = $region52
        $region51: #{tpu_custom_call.1} parent=39 // pred_region
          %276 = dma.done [#allocation6], 6144
        $region52: #{tpu_custom_call.1} parent=39 // pred_fallthru
          _
        // Predicated region
        $region53: #{tpu_custom_call.1} parent=39 // pred_check
          %p277 = pneg %p108
        $region54: #{tpu_custom_call.1} parent=39 // pred_check_branch
          %279 = sbr.rel (%p277) target = $region56
        $region55: #{tpu_custom_call.1} parent=39 // pred_region
          %281 = dma.done [#allocation9], 6144
        $region56: #{tpu_custom_call.1} parent=39 // pred_fallthru
          _
        // Predicated region
        $region57: #{tpu_custom_call.1} parent=39 // pred_check
          %p282 = pneg %p129
        $region58: #{tpu_custom_call.1} parent=39 // pred_check_branch
          %284 = sbr.rel (%p282) target = $region60
        $region59: #{tpu_custom_call.1} parent=39 // pred_region
          %286 = dma.done [#allocation9], 128
        $region60: #{tpu_custom_call.1} parent=39 // pred_fallthru
          _
        %s287 = sand.u32 %s32, 1
        %s288 = scalar_lea.sflag [#allocation3], %s287
        %s289 = sand.u32 %s32, 1
        %s290 = smul.addr %s289, 16
        %s291 = scalar_lea.vmem [#allocation2], %s290
        %p292 = pneg %p45
        %p293 = pneg %p42
        %p294 = pneg %p66
        %p295 = pneg %p63
        %p296 = pneg %p87
        %p297 = pneg %p84
        %p298 = pneg %p108
        %p299 = pneg %p105
        %p300 = pneg %p129
        %p301 = pneg %p126
        %p302 = pneg %p155
        %p303 = pneg %p152
        %s304 = sand.u32 %s142, 1
        %s305 = scalar_lea.sflag [#allocation4], %s304
        %s306 = sand.u32 %s142, 1
        %s307 = smul.addr %s306, 16
        %s308 = scalar_lea.vmem [#allocation11], %s307
        %v309 = vld [vmem:[%s261] sm:$0xff]
        %v310 = vld [vmem:[%s261 + $0x8] sm:$0xff]
        %v311 = vld [vmem:[#allocation5] sm:$0xff]
        %v312 = vld [vmem:[#allocation5 + $0x8] sm:$0xff]
        %s313 = scalar_lea.vmem [#allocation5], 16
        %v314 = vld [vmem:[%s313] sm:$0xff]
        %v315 = vld [vmem:[%s313 + $0x8] sm:$0xff]
        %vm316 = vcmask 130048
        %v318 = vsel %vm316, %v311, 0
        %v321 = vsel %vm316, %v312, 0
        %323 = vmatpush.msra.mxu0 0.0
        %324 = vmatpush.msra.mxu0 0.0
        %325 = vmatpush.msra.mxu0 0.0
        %326 = vmatpush.msra.mxu0 0.0
        %327 = vmatpush.msra.mxu0 0.0
        %328 = vmatpush.msra.mxu0 0.0
        %329 = vmatpush.msra.mxu0 0.0
        %330 = vmatpush.msra.mxu0 0.0
        %331 = vmatpush.msra.mxu0 0.0
        %332 = vmatpush.msra.mxu0 0.0
        %333 = vmatpush.msra.mxu0 0.0
        %334 = vmatpush.msra.mxu0 0.0
        %335 = vmatpush.msra.mxu0 0.0
        %336 = vmatpush.msra.mxu0 0.0
        %337 = vmatpush.msra.mxu0 %v310
        %338 = vmatpush.msra.mxu0 %v309
        %339 = vmatmul.f32.gmra.mxu0 %v318
        %v340 = vpop.f32.mrf.mxu0
        %v341 = vadd.f32 0.0, %v340
        %342 = vmatmul.f32.gmra.mxu0 %v321
        %v343 = vpop.f32.mrf.mxu0
        %v344 = vadd.f32 0.0, %v343
        %345 = vdwg.mxu0
        %v347 = vsel %vm316, %v314, 0
        %v350 = vsel %vm316, %v315, 0
        %352 = vmatpush.msra.mxu0 0.0
        %353 = vmatpush.msra.mxu0 0.0
        %354 = vmatpush.msra.mxu0 0.0
        %355 = vmatpush.msra.mxu0 0.0
        %356 = vmatpush.msra.mxu0 0.0
        %357 = vmatpush.msra.mxu0 0.0
        %358 = vmatpush.msra.mxu0 0.0
        %359 = vmatpush.msra.mxu0 0.0
        %360 = vmatpush.msra.mxu0 0.0
        %361 = vmatpush.msra.mxu0 0.0
        %362 = vmatpush.msra.mxu0 0.0
        %363 = vmatpush.msra.mxu0 0.0
        %364 = vmatpush.msra.mxu0 0.0
        %365 = vmatpush.msra.mxu0 0.0
        %366 = vmatpush.msra.mxu0 %v310
        %367 = vmatpush.msra.mxu0 %v309
        %368 = vmatmul.f32.gmra.mxu0 %v347
        %v369 = vpop.f32.mrf.mxu0
        %v370 = vadd.f32 0.0, %v369
        %371 = vmatmul.f32.gmra.mxu0 %v350
        %v372 = vpop.f32.mrf.mxu0
        %v373 = vadd.f32 0.0, %v372
        %374 = vdwg.mxu0
        %v375 = vld [vmem:[#allocation7] sm:$0xff]
        %v376 = vld [vmem:[#allocation7 + $0x8] sm:$0xff]
        %v377 = vld [vmem:[#allocation7 + $0x10] sm:$0xff]
        %v378 = vld [vmem:[#allocation7 + $0x18] sm:$0xff]
        %v379 = vld [vmem:[#allocation7 + $0x20] sm:$0xff]
        %v380 = vld [vmem:[#allocation7 + $0x28] sm:$0xff]
        %v381 = vld [vmem:[#allocation7 + $0x30] sm:$0xff]
        %v382 = vld [vmem:[#allocation7 + $0x38] sm:$0xff]
        %v383 = vld [vmem:[#allocation7 + $0x40] sm:$0xff]
        %v384 = vld [vmem:[#allocation7 + $0x48] sm:$0xff]
        %v385 = vld [vmem:[#allocation7 + $0x50] sm:$0xff]
        %v386 = vld [vmem:[#allocation7 + $0x58] sm:$0xff]
        %v387 = vld [vmem:[#allocation7 + $0x60] sm:$0xff]
        %v388 = vld [vmem:[#allocation7 + $0x68] sm:$0xff]
        %v389 = vld [vmem:[#allocation7 + $0x70] sm:$0xff]
        %v390 = vld [vmem:[#allocation7 + $0x78] sm:$0xff]
        %s391 = scalar_lea.vmem [#allocation7], 128
        %v392 = vld [vmem:[%s391] sm:$0xff]
        %v393 = vld [vmem:[%s391 + $0x8] sm:$0xff]
        %v394 = vld [vmem:[%s391 + $0x10] sm:$0xff]
        %v395 = vld [vmem:[%s391 + $0x18] sm:$0xff]
        %v396 = vld [vmem:[%s391 + $0x20] sm:$0xff]
        %v397 = vld [vmem:[%s391 + $0x28] sm:$0xff]
        %v398 = vld [vmem:[%s391 + $0x30] sm:$0xff]
        %v399 = vld [vmem:[%s391 + $0x38] sm:$0xff]
        %v400 = vld [vmem:[%s391 + $0x40] sm:$0xff]
        %v401 = vld [vmem:[%s391 + $0x48] sm:$0xff]
        %v402 = vld [vmem:[%s391 + $0x50] sm:$0xff]
        %v403 = vld [vmem:[%s391 + $0x58] sm:$0xff]
        %v404 = vld [vmem:[%s391 + $0x60] sm:$0xff]
        %v405 = vld [vmem:[%s391 + $0x68] sm:$0xff]
        %v406 = vld [vmem:[%s391 + $0x70] sm:$0xff]
        %v407 = vld [vmem:[%s391 + $0x78] sm:$0xff]
        %vm408 = vcmask 523264
        %v410 = vsel %vm408, %v309, 0
        %v413 = vsel %vm408, %v310, 0
        %415 = vmatpush.msra.mxu0 0.0
        %416 = vmatpush.msra.mxu0 0.0
        %417 = vmatpush.msra.mxu0 0.0
        %418 = vmatpush.msra.mxu0 0.0
        %419 = vmatpush.msra.mxu0 0.0
        %420 = vmatpush.msra.mxu0 0.0
        %421 = vmatpush.msra.mxu0 0.0
        %422 = vmatpush.msra.mxu0 0.0
        %423 = vmatpush.msra.mxu0 %v406
        %424 = vmatpush.msra.mxu0 %v404
        %425 = vmatpush.msra.mxu0 %v402
        %426 = vmatpush.msra.mxu0 %v400
        %427 = vmatpush.msra.mxu0 %v398
        %428 = vmatpush.msra.mxu0 %v396
        %429 = vmatpush.msra.mxu0 %v394
        %430 = vmatpush.msra.mxu0 %v392
        %431 = vmatmul.f32.gmra.mxu0 %v410
        %v432 = vpop.f32.mrf.mxu0
        %v433 = vadd.f32 0.0, %v432
        %434 = vmatmul.f32.gmra.mxu0 %v413
        %v435 = vpop.f32.mrf.mxu0
        %v436 = vadd.f32 0.0, %v435
        %437 = vdwg.mxu0
        %438 = vmatpush.msra.mxu0 0.0
        %439 = vmatpush.msra.mxu0 0.0
        %440 = vmatpush.msra.mxu0 0.0
        %441 = vmatpush.msra.mxu0 0.0
        %442 = vmatpush.msra.mxu0 0.0
        %443 = vmatpush.msra.mxu0 0.0
        %444 = vmatpush.msra.mxu0 0.0
        %445 = vmatpush.msra.mxu0 0.0
        %446 = vmatpush.msra.mxu0 %v407
        %447 = vmatpush.msra.mxu0 %v405
        %448 = vmatpush.msra.mxu0 %v403
        %449 = vmatpush.msra.mxu0 %v401
        %450 = vmatpush.msra.mxu0 %v399
        %451 = vmatpush.msra.mxu0 %v397
        %452 = vmatpush.msra.mxu0 %v395
        %453 = vmatpush.msra.mxu0 %v393
        %454 = vmatmul.f32.gmra.mxu0 %v410
        %v455 = vpop.f32.mrf.mxu0
        %v456 = vadd.f32 0.0, %v455
        %457 = vmatmul.f32.gmra.mxu0 %v413
        %v458 = vpop.f32.mrf.mxu0
        %v459 = vadd.f32 0.0, %v458
        %460 = vdwg.mxu0
        %v462 = vsel %vm408, %v341, 0
        %v465 = vsel %vm408, %v344, 0
        %467 = vmatpush.msra.mxu0 0.0
        %468 = vmatpush.msra.mxu0 0.0
        %469 = vmatpush.msra.mxu0 0.0
        %470 = vmatpush.msra.mxu0 0.0
        %471 = vmatpush.msra.mxu0 0.0
        %472 = vmatpush.msra.mxu0 0.0
        %473 = vmatpush.msra.mxu0 0.0
        %474 = vmatpush.msra.mxu0 0.0
        %475 = vmatpush.msra.mxu0 %v389
        %476 = vmatpush.msra.mxu0 %v387
        %477 = vmatpush.msra.mxu0 %v385
        %478 = vmatpush.msra.mxu0 %v383
        %479 = vmatpush.msra.mxu0 %v381
        %480 = vmatpush.msra.mxu0 %v379
        %481 = vmatpush.msra.mxu0 %v377
        %482 = vmatpush.msra.mxu0 %v375
        %483 = vmatmul.f32.gmra.mxu0 %v462
        %v484 = vpop.f32.mrf.mxu0
        %v485 = vadd.f32 %v433, %v484
        %486 = vmatmul.f32.gmra.mxu0 %v465
        %v487 = vpop.f32.mrf.mxu0
        %v488 = vadd.f32 %v436, %v487
        %489 = vdwg.mxu0
        %490 = vmatpush.msra.mxu0 0.0
        %491 = vmatpush.msra.mxu0 0.0
        %492 = vmatpush.msra.mxu0 0.0
        %493 = vmatpush.msra.mxu0 0.0
        %494 = vmatpush.msra.mxu0 0.0
        %495 = vmatpush.msra.mxu0 0.0
        %496 = vmatpush.msra.mxu0 0.0
        %497 = vmatpush.msra.mxu0 0.0
        %498 = vmatpush.msra.mxu0 %v390
        %499 = vmatpush.msra.mxu0 %v388
        %500 = vmatpush.msra.mxu0 %v386
        %501 = vmatpush.msra.mxu0 %v384
        %502 = vmatpush.msra.mxu0 %v382
        %503 = vmatpush.msra.mxu0 %v380
        %504 = vmatpush.msra.mxu0 %v378
        %505 = vmatpush.msra.mxu0 %v376
        %506 = vmatmul.f32.gmra.mxu0 %v462
        %v507 = vpop.f32.mrf.mxu0
        %v508 = vadd.f32 %v456, %v507
        %509 = vmatmul.f32.gmra.mxu0 %v465
        %v510 = vpop.f32.mrf.mxu0
        %v511 = vadd.f32 %v459, %v510
        %512 = vdwg.mxu0
        %s513 = scalar_lea.vmem [#allocation7], 256
        %v514 = vld [vmem:[%s513] sm:$0xff]
        %v515 = vld [vmem:[%s513 + $0x8] sm:$0xff]
        %v516 = vld [vmem:[%s513 + $0x10] sm:$0xff]
        %v517 = vld [vmem:[%s513 + $0x18] sm:$0xff]
        %v518 = vld [vmem:[%s513 + $0x20] sm:$0xff]
        %v519 = vld [vmem:[%s513 + $0x28] sm:$0xff]
        %v520 = vld [vmem:[%s513 + $0x30] sm:$0xff]
        %v521 = vld [vmem:[%s513 + $0x38] sm:$0xff]
        %v522 = vld [vmem:[%s513 + $0x40] sm:$0xff]
        %v523 = vld [vmem:[%s513 + $0x48] sm:$0xff]
        %v524 = vld [vmem:[%s513 + $0x50] sm:$0xff]
        %v525 = vld [vmem:[%s513 + $0x58] sm:$0xff]
        %v526 = vld [vmem:[%s513 + $0x60] sm:$0xff]
        %v527 = vld [vmem:[%s513 + $0x68] sm:$0xff]
        %v528 = vld [vmem:[%s513 + $0x70] sm:$0xff]
        %v529 = vld [vmem:[%s513 + $0x78] sm:$0xff]
        %v531 = vsel %vm408, %v370, 0
        %v534 = vsel %vm408, %v373, 0
        %536 = vmatpush.msra.mxu0 0.0
        %537 = vmatpush.msra.mxu0 0.0
        %538 = vmatpush.msra.mxu0 0.0
        %539 = vmatpush.msra.mxu0 0.0
        %540 = vmatpush.msra.mxu0 0.0
        %541 = vmatpush.msra.mxu0 0.0
        %542 = vmatpush.msra.mxu0 0.0
        %543 = vmatpush.msra.mxu0 0.0
        %544 = vmatpush.msra.mxu0 %v528
        %545 = vmatpush.msra.mxu0 %v526
        %546 = vmatpush.msra.mxu0 %v524
        %547 = vmatpush.msra.mxu0 %v522
        %548 = vmatpush.msra.mxu0 %v520
        %549 = vmatpush.msra.mxu0 %v518
        %550 = vmatpush.msra.mxu0 %v516
        %551 = vmatpush.msra.mxu0 %v514
        %552 = vmatmul.f32.gmra.mxu0 %v531
        %v553 = vpop.f32.mrf.mxu0
        %v554 = vadd.f32 0.0, %v553
        %555 = vmatmul.f32.gmra.mxu0 %v534
        %v556 = vpop.f32.mrf.mxu0
        %v557 = vadd.f32 0.0, %v556
        %558 = vdwg.mxu0
        %559 = vmatpush.msra.mxu0 0.0
        %560 = vmatpush.msra.mxu0 0.0
        %561 = vmatpush.msra.mxu0 0.0
        %562 = vmatpush.msra.mxu0 0.0
        %563 = vmatpush.msra.mxu0 0.0
        %564 = vmatpush.msra.mxu0 0.0
        %565 = vmatpush.msra.mxu0 0.0
        %566 = vmatpush.msra.mxu0 0.0
        %567 = vmatpush.msra.mxu0 %v529
        %568 = vmatpush.msra.mxu0 %v527
        %569 = vmatpush.msra.mxu0 %v525
        %570 = vmatpush.msra.mxu0 %v523
        %571 = vmatpush.msra.mxu0 %v521
        %572 = vmatpush.msra.mxu0 %v519
        %573 = vmatpush.msra.mxu0 %v517
        %574 = vmatpush.msra.mxu0 %v515
        %575 = vmatmul.f32.gmra.mxu0 %v531
        %v576 = vpop.f32.mrf.mxu0
        %v577 = vadd.f32 0.0, %v576
        %578 = vmatmul.f32.gmra.mxu0 %v534
        %v579 = vpop.f32.mrf.mxu0
        %v580 = vadd.f32 0.0, %v579
        %581 = vdwg.mxu0
        %v582 = vadd.f32 %v485, %v554
        %v583 = vadd.f32 %v508, %v577
        %v584 = vadd.f32 %v488, %v557
        %v585 = vadd.f32 %v511, %v580
        %v586 = vld [vmem:[#allocation10] sm:$0x1]
        %v587 = vperm.slane %v586, 0
        %v588 = vmul.f32 %v582, %v587
        %v589 = vmul.f32 %v584, %v587
        %v590 = vld [vmem:[#allocation10 + $0x1] sm:$0x1]
        %v591 = vperm.slane %v590, 0
        %v592 = vadd.f32 %v588, %v591
        %v593 = vadd.f32 %v589, %v591
        %v594 = vmax.f32 %v592, 0.0
        %v595 = vmax.f32 %v593, 0.0
        %v596 = vld [vmem:[#allocation10 + $0x4] sm:$0x1]
        %v597 = vperm.slane %v596, 0
        %v598 = vmul.f32 %v583, %v597
        %v599 = vmul.f32 %v585, %v597
        %v600 = vld [vmem:[#allocation10 + $0x5] sm:$0x1]
        %v601 = vperm.slane %v600, 0
        %v602 = vadd.f32 %v598, %v601
        %v603 = vadd.f32 %v599, %v601
        %604 = vmatpush.msra.mxu0 0.0
        %605 = vmatpush.msra.mxu0 0.0
        %606 = vmatpush.msra.mxu0 0.0
        %607 = vmatpush.msra.mxu0 0.0
        %608 = vmatpush.msra.mxu0 0.0
        %609 = vmatpush.msra.mxu0 0.0
        %610 = vmatpush.msra.mxu0 0.0
        %611 = vmatpush.msra.mxu0 0.0
        %612 = vmatpush.msra.mxu0 0.0
        %613 = vmatpush.msra.mxu0 0.0
        %614 = vmatpush.msra.mxu0 0.0
        %615 = vmatpush.msra.mxu0 0.0
        %616 = vmatpush.msra.mxu0 0.0
        %617 = vmatpush.msra.mxu0 0.0
        %618 = vmatpush.msra.mxu0 %v595
        %619 = vmatpush.msra.mxu0 %v594
        %620 = vmatmul.f32.gmra.mxu0 %v318
        %v621 = vpop.f32.mrf.mxu0
        %v622 = vadd.f32 0.0, %v621
        %623 = vmatmul.f32.gmra.mxu0 %v321
        %v624 = vpop.f32.mrf.mxu0
        %v625 = vadd.f32 0.0, %v624
        %626 = vdwg.mxu0
        %627 = vmatpush.msra.mxu0 0.0
        %628 = vmatpush.msra.mxu0 0.0
        %629 = vmatpush.msra.mxu0 0.0
        %630 = vmatpush.msra.mxu0 0.0
        %631 = vmatpush.msra.mxu0 0.0
        %632 = vmatpush.msra.mxu0 0.0
        %633 = vmatpush.msra.mxu0 0.0
        %634 = vmatpush.msra.mxu0 0.0
        %635 = vmatpush.msra.mxu0 0.0
        %636 = vmatpush.msra.mxu0 0.0
        %637 = vmatpush.msra.mxu0 0.0
        %638 = vmatpush.msra.mxu0 0.0
        %639 = vmatpush.msra.mxu0 0.0
        %640 = vmatpush.msra.mxu0 0.0
        %641 = vmatpush.msra.mxu0 %v595
        %642 = vmatpush.msra.mxu0 %v594
        %643 = vmatmul.f32.gmra.mxu0 %v347
        %v644 = vpop.f32.mrf.mxu0
        %v645 = vadd.f32 0.0, %v644
        %646 = vmatmul.f32.gmra.mxu0 %v350
        %v647 = vpop.f32.mrf.mxu0
        %v648 = vadd.f32 0.0, %v647
        %649 = vdwg.mxu0
        %v650 = vld [vmem:[#allocation8] sm:$0xff]
        %v651 = vld [vmem:[#allocation8 + $0x8] sm:$0xff]
        %v652 = vld [vmem:[#allocation8 + $0x10] sm:$0xff]
        %v653 = vld [vmem:[#allocation8 + $0x18] sm:$0xff]
        %v654 = vld [vmem:[#allocation8 + $0x20] sm:$0xff]
        %v655 = vld [vmem:[#allocation8 + $0x28] sm:$0xff]
        %v656 = vld [vmem:[#allocation8 + $0x30] sm:$0xff]
        %v657 = vld [vmem:[#allocation8 + $0x38] sm:$0xff]
        %v658 = vld [vmem:[#allocation8 + $0x40] sm:$0xff]
        %v659 = vld [vmem:[#allocation8 + $0x48] sm:$0xff]
        %v660 = vld [vmem:[#allocation8 + $0x50] sm:$0xff]
        %v661 = vld [vmem:[#allocation8 + $0x58] sm:$0xff]
        %v662 = vld [vmem:[#allocation8 + $0x60] sm:$0xff]
        %v663 = vld [vmem:[#allocation8 + $0x68] sm:$0xff]
        %v664 = vld [vmem:[#allocation8 + $0x70] sm:$0xff]
        %v665 = vld [vmem:[#allocation8 + $0x78] sm:$0xff]
        %s666 = scalar_lea.vmem [#allocation8], 128
        %v667 = vld [vmem:[%s666] sm:$0xff]
        %v668 = vld [vmem:[%s666 + $0x8] sm:$0xff]
        %v669 = vld [vmem:[%s666 + $0x10] sm:$0xff]
        %v670 = vld [vmem:[%s666 + $0x18] sm:$0xff]
        %v671 = vld [vmem:[%s666 + $0x20] sm:$0xff]
        %v672 = vld [vmem:[%s666 + $0x28] sm:$0xff]
        %v673 = vld [vmem:[%s666 + $0x30] sm:$0xff]
        %v674 = vld [vmem:[%s666 + $0x38] sm:$0xff]
        %v675 = vld [vmem:[%s666 + $0x40] sm:$0xff]
        %v676 = vld [vmem:[%s666 + $0x48] sm:$0xff]
        %v677 = vld [vmem:[%s666 + $0x50] sm:$0xff]
        %v678 = vld [vmem:[%s666 + $0x58] sm:$0xff]
        %v679 = vld [vmem:[%s666 + $0x60] sm:$0xff]
        %v680 = vld [vmem:[%s666 + $0x68] sm:$0xff]
        %v681 = vld [vmem:[%s666 + $0x70] sm:$0xff]
        %v682 = vld [vmem:[%s666 + $0x78] sm:$0xff]
        %683 = vmatpush.msra.mxu0 %v682
        %684 = vmatpush.msra.mxu0 %v681
        %685 = vmatpush.msra.mxu0 %v680
        %686 = vmatpush.msra.mxu0 %v679
        %687 = vmatpush.msra.mxu0 %v678
        %688 = vmatpush.msra.mxu0 %v677
        %689 = vmatpush.msra.mxu0 %v676
        %690 = vmatpush.msra.mxu0 %v675
        %691 = vmatpush.msra.mxu0 %v674
        %692 = vmatpush.msra.mxu0 %v673
        %693 = vmatpush.msra.mxu0 %v672
        %694 = vmatpush.msra.mxu0 %v671
        %695 = vmatpush.msra.mxu0 %v670
        %696 = vmatpush.msra.mxu0 %v669
        %697 = vmatpush.msra.mxu0 %v668
        %698 = vmatpush.msra.mxu0 %v667
        %699 = vmatmul.f32.gmra.mxu0 %v594
        %v700 = vpop.f32.mrf.mxu0
        %v701 = vadd.f32 0.0, %v700
        %702 = vmatmul.f32.gmra.mxu0 %v595
        %v703 = vpop.f32.mrf.mxu0
        %v704 = vadd.f32 0.0, %v703
        %705 = vdwg.mxu0
        %706 = vmatpush.msra.mxu0 %v665
        %707 = vmatpush.msra.mxu0 %v664
        %708 = vmatpush.msra.mxu0 %v663
        %709 = vmatpush.msra.mxu0 %v662
        %710 = vmatpush.msra.mxu0 %v661
        %711 = vmatpush.msra.mxu0 %v660
        %712 = vmatpush.msra.mxu0 %v659
        %713 = vmatpush.msra.mxu0 %v658
        %714 = vmatpush.msra.mxu0 %v657
        %715 = vmatpush.msra.mxu0 %v656
        %716 = vmatpush.msra.mxu0 %v655
        %717 = vmatpush.msra.mxu0 %v654
        %718 = vmatpush.msra.mxu0 %v653
        %719 = vmatpush.msra.mxu0 %v652
        %720 = vmatpush.msra.mxu0 %v651
        %721 = vmatpush.msra.mxu0 %v650
        %722 = vmatmul.f32.gmra.mxu0 %v622
        %v723 = vpop.f32.mrf.mxu0
        %v724 = vadd.f32 %v701, %v723
        %725 = vmatmul.f32.gmra.mxu0 %v625
        %v726 = vpop.f32.mrf.mxu0
        %v727 = vadd.f32 %v704, %v726
        %728 = vdwg.mxu0
        %s729 = scalar_lea.vmem [#allocation8], 256
        %v730 = vld [vmem:[%s729] sm:$0xff]
        %v731 = vld [vmem:[%s729 + $0x8] sm:$0xff]
        %v732 = vld [vmem:[%s729 + $0x10] sm:$0xff]
        %v733 = vld [vmem:[%s729 + $0x18] sm:$0xff]
        %v734 = vld [vmem:[%s729 + $0x20] sm:$0xff]
        %v735 = vld [vmem:[%s729 + $0x28] sm:$0xff]
        %v736 = vld [vmem:[%s729 + $0x30] sm:$0xff]
        %v737 = vld [vmem:[%s729 + $0x38] sm:$0xff]
        %v738 = vld [vmem:[%s729 + $0x40] sm:$0xff]
        %v739 = vld [vmem:[%s729 + $0x48] sm:$0xff]
        %v740 = vld [vmem:[%s729 + $0x50] sm:$0xff]
        %v741 = vld [vmem:[%s729 + $0x58] sm:$0xff]
        %v742 = vld [vmem:[%s729 + $0x60] sm:$0xff]
        %v743 = vld [vmem:[%s729 + $0x68] sm:$0xff]
        %v744 = vld [vmem:[%s729 + $0x70] sm:$0xff]
        %v745 = vld [vmem:[%s729 + $0x78] sm:$0xff]
        %746 = vmatpush.msra.mxu0 %v745
        %747 = vmatpush.msra.mxu0 %v744
        %748 = vmatpush.msra.mxu0 %v743
        %749 = vmatpush.msra.mxu0 %v742
        %750 = vmatpush.msra.mxu0 %v741
        %751 = vmatpush.msra.mxu0 %v740
        %752 = vmatpush.msra.mxu0 %v739
        %753 = vmatpush.msra.mxu0 %v738
        %754 = vmatpush.msra.mxu0 %v737
        %755 = vmatpush.msra.mxu0 %v736
        %756 = vmatpush.msra.mxu0 %v735
        %757 = vmatpush.msra.mxu0 %v734
        %758 = vmatpush.msra.mxu0 %v733
        %759 = vmatpush.msra.mxu0 %v732
        %760 = vmatpush.msra.mxu0 %v731
        %761 = vmatpush.msra.mxu0 %v730
        %762 = vmatmul.f32.gmra.mxu0 %v645
        %v763 = vpop.f32.mrf.mxu0
        %v764 = vadd.f32 0.0, %v763
        %765 = vmatmul.f32.gmra.mxu0 %v648
        %v766 = vpop.f32.mrf.mxu0
        %v767 = vadd.f32 0.0, %v766
        %768 = vdwg.mxu0
        %v769 = vadd.f32 %v724, %v764
        %v770 = vadd.f32 %v727, %v767
        %v771 = vld [vmem:[#allocation10 + $0x2] sm:$0x1]
        %v772 = vperm.slane %v771, 0
        %v773 = vmul.f32 %v769, %v772
        %v774 = vmul.f32 %v770, %v772
        %v775 = vld [vmem:[#allocation10 + $0x3] sm:$0x1]
        %v776 = vperm.slane %v775, 0
        %v777 = vadd.f32 %v773, %v776
        %v778 = vadd.f32 %v774, %v776
        %v779 = vadd.f32 %v777, %v602
        %v780 = vadd.f32 %v778, %v603
        %v781 = vmax.f32 %v779, 0.0
        %v782 = vmax.f32 %v780, 0.0
        %783 = vst [vmem:[%s308] sm:$0xff] %v781
        %784 = vst [vmem:[%s308 + $0x8] sm:$0xff] %v782
        %s785 = sand.u32 %s142, 1
        %s786 = scalar_lea.sflag [#allocation4], %s785
        %s787 = sand.u32 %s142, 1
        %s788 = smul.addr %s787, 16
        %s789 = scalar_lea.vmem [#allocation11], %s788
        // Predicated region
        $region61: #{tpu_custom_call.1} parent=39 // pred_check
          %p790 = pneg %p152
        $region62: #{tpu_custom_call.1} parent=39 // pred_check_branch
          %792 = sbr.rel (%p790) target = $region64
        $region63: #{tpu_custom_call.1} parent=39 // pred_region
          %794 = vsyncadd %s786, 0
          %s795 = smul.addr %s24, 2
          %s796 = smul.addr %s795, 8
          %s797 = scalar_lea.hbm %s5, %s796
          %s798 = sshll.u32 %s789, 4
          %s799 = int_to_ptr.vmem [resolvable:$true] %s798
          %s800 = sshll.u32 %s797, 4
          %s801 = int_to_ptr.hbm [resolvable:$true] %s800
          %806 = dma.vmem_to_hbm [thread:$0]  %s799, 256, %s801, %s786, 128, 128, 8
        $region64: #{tpu_custom_call.1} parent=39 // pred_fallthru
          _
      $region40: #{tpu_custom_call.1} parent=5 // pred_fallthru
        _
      %p807 = scmp.le.s32.totalorder 2, %s19
      // Predicated region
      $region65: #{tpu_custom_call.1} parent=5 // pred_check
        %p808 = pneg %p807
      $region66: #{tpu_custom_call.1} parent=5 // pred_check_branch
        %810 = sbr.rel (%p808) target = $region68
      $region67: #{tpu_custom_call.1} parent=5 // pred_region
        %s811 = ssub.s32 %s19, 2
        // Predicated region
        $region69: #{tpu_custom_call.1} parent=67 // pred_check
          %p812 = pneg %p158
        $region70: #{tpu_custom_call.1} parent=67 // pred_check_branch
          %814 = sbr.rel (%p812) target = $region72
        $region71: #{tpu_custom_call.1} parent=67 // pred_region
          %s815 = sand.u32 %s143, 1
          %s816 = scalar_lea.sflag [#allocation4], %s815
          %s817 = sand.u32 %s143, 1
          %s818 = smul.addr %s817, 16
          %s819 = scalar_lea.vmem [#allocation11], %s818
          %821 = dma.done %s816, 256
        $region72: #{tpu_custom_call.1} parent=67 // pred_fallthru
          _
      $region68: #{tpu_custom_call.1} parent=5 // pred_fallthru
        _
    $region6: #{tpu_custom_call.1} parent=1 // loop_footer
      %s23 = sadd.s32 1, %s19
    $region7: #{tpu_custom_call.1} parent=1 // loop_footer_branch
      %18 = sbr.rel target = $region3
    $region8: #{tpu_custom_call.1} parent=1 // loop_exit
      _
    %822 = vsyncpa [#allocation3], 1
    %s823 = scalar_lea.sflag [#allocation3], 1
    %824 = vsyncpa %s823, 1
    %825 = vsyncpa [#allocation6], 1
    %826 = vsyncpa [#allocation9], 1
    %827 = vsyncpa [#allocation4], 1
    %s828 = scalar_lea.sflag [#allocation4], 1
    %829 = vsyncpa %s828, 1

</llo_original>
